<compile_context>
chip_gen: v6e
topology: v6e:2x2x1
jax: 0.10.0
libtpu: 0.0.40
codegen_flags: <defaults>
</compile_context>

<pallas_src>
import jax
import jax.numpy as jnp
from jax.experimental import pallas as pl
from jax.experimental.pallas import tpu as pltpu


def _round_up(x, m):
    return ((x + m - 1) // m) * m


def _vmem_limit_bytes():
    # ~48 MiB: far above v5e/v6e's 16/32 MiB scoped defaults, yet <= 3/4 of
    # v7x's 64 MiB per-TC VMEM so Mosaic keeps headroom for internal scratch.
    limit = 48 * 1024 * 1024
    try:
        cap = int(pltpu.get_tpu_info().vmem_capacity_bytes)
        limit = min(limit, max(16 * 1024 * 1024, cap * 3 // 4))
    except Exception:
        pass
    return limit


def _wise_mse_kernel(x1_ref, x2_ref, sim_ref, ss1_ref, ss2_ref, dot_ref):
    # grid = (batch tiles [parallel], feature tiles [arbitrary reduction])
    k = pl.program_id(1)

    @pl.when(k == 0)
    def _():
        ss1_ref[...] = jnp.zeros_like(ss1_ref)
        ss2_ref[...] = jnp.zeros_like(ss2_ref)
        dot_ref[...] = jnp.zeros_like(dot_ref)

    td = x1_ref.shape[1]
    # Fused single pass over lane chunks: load each chunk of x1/x2 once and
    # compute all three partial sums from it (bounded static unroll).
    ch = 512 if (td % 512 == 0 and td // 512 <= 16) else td
    nch = td // ch

    ss1 = jnp.zeros(ss1_ref.shape, jnp.float32)
    ss2 = jnp.zeros(ss2_ref.shape, jnp.float32)
    dot = jnp.zeros(dot_ref.shape, jnp.float32)
    for c in range(nch):
        x1 = x1_ref[:, c * ch:(c + 1) * ch].astype(jnp.float32)
        x2 = x2_ref[:, c * ch:(c + 1) * ch].astype(jnp.float32)
        ss1 = ss1 + jnp.sum(x1 * x1, axis=1, keepdims=True)
        ss2 = ss2 + jnp.sum(x2 * x2, axis=1, keepdims=True)
        dot = dot + jnp.sum(x1 * x2, axis=1, keepdims=True)

    ss1_ref[...] += ss1
    ss2_ref[...] += ss2
    dot_ref[...] += dot

    @pl.when(k == pl.num_programs(1) - 1)
    def _():
        # F.normalize eps=1e-12: max(sqrt(ss), eps) == sqrt(max(ss, eps^2)).
        eps2 = jnp.float32(1e-24)
        inv1 = jax.lax.rsqrt(jnp.maximum(ss1_ref[...], eps2))   # EUP, off-VALU
        inv2 = jax.lax.rsqrt(jnp.maximum(ss2_ref[...], eps2))
        sim_ref[...] = dot_ref[...] * inv1 * inv2


def wise_mse(input1, input2, label, return_sim=False, *,
             block_rows=None, block_cols=None):
    """JAX/Pallas equivalent of wiseMSE.forward.

    block_rows / block_cols are optional tile overrides (block_cols must be a
    multiple of 128 when smaller than the feature dim).
    """
    B, D = input1.shape
    itemsize = jnp.dtype(input1.dtype).itemsize
    # Sub-32-bit dtypes pack rows along sublanes: 8-align f32, 16-align bf16,
    # 32-align int8/fp8 tiles (and the batch padding).
    row_align = max(8, 32 // itemsize)

    vmem_limit = _vmem_limit_bytes()
    # ~8 MiB per input block -> 2 inputs x 2 pipeline buffers ~= 32 MiB.
    budget = min(8 * 1024 * 1024, vmem_limit // 6)

    # ---- feature (reduction) axis tile -------------------------------------
    if block_cols is not None:
        td = int(block_cols)
    elif D * itemsize * row_align <= budget:
        td = D                                    # whole rows fit the budget
    else:
        # Huge D: tile the feature axis too ("arbitrary" reduction axis).
        tb_hint = 16 * row_align
        td = max(128, (budget // (tb_hint * itemsize)) // 128 * 128)
    if td >= D:
        td, pD, nd = D, D, 1
    else:
        pD = _round_up(D, td)
        nd = pD // td

    # ---- batch axis tile (sized by bytes, no fixed row cap) ----------------
    bp = _round_up(B, row_align)
    if block_rows is not None:
        tb = min(_round_up(int(block_rows), row_align), bp)
    else:
        tb = (budget // max(1, td * itemsize)) // row_align * row_align
        tb = max(row_align, min(tb, bp))
        # Keep >= 2 batch steps when possible so v7x's two TensorCores share
        # the "parallel" axis.
        if tb >= bp and bp >= 2 * row_align:
            tb = _round_up((bp + 1) // 2, row_align)
    bp = _round_up(B, tb)
    nb = bp // tb

    # ---- pad to tile multiples (zero rows/cols contribute exactly 0) -------
    x1, x2 = input1, input2
    if bp != B or pD != D:
        x1 = jnp.pad(x1, ((0, bp - B), (0, pD - D)))
        x2 = jnp.pad(x2, ((0, bp - B), (0, pD - D)))

    sim2d = pl.pallas_call(
        _wise_mse_kernel,
        out_shape=jax.ShapeDtypeStruct((bp, 1), jnp.float32),
        grid_spec=pltpu.PrefetchScalarGridSpec(
            num_scalar_prefetch=0,
            grid=(nb, nd),
            in_specs=[
                pl.BlockSpec((tb, td), lambda i, k: (i, k)),
                pl.BlockSpec((tb, td), lambda i, k: (i, k)),
            ],
            out_specs=pl.BlockSpec((tb, 1), lambda i, k: (i, 0)),
            scratch_shapes=[pltpu.VMEM((tb, 1), jnp.float32)] * 3,
        ),
        compiler_params=pltpu.CompilerParams(
            dimension_semantics=("parallel", "arbitrary"),
            vmem_limit_bytes=vmem_limit,
        ),
        cost_estimate=pl.CostEstimate(
            flops=6 * B * D,
            transcendentals=2 * B,
            bytes_accessed=2 * B * D * itemsize + 4 * B,
        ),
    )(x1, x2)

    # Tiny epilogue in plain JAX: loss/label math on B-sized vectors only.
    sim = sim2d[:B, 0]
    lbl = label.astype(jnp.float32)
    loss = jnp.mean(lbl * (sim - 1.0) ** 2 + (1.0 - lbl) * (sim * sim))
    if return_sim:
        return loss, sim
    return loss


def _reference(input1, input2, label):
    # Pure-JAX reference of the PyTorch wiseMSE.forward (f32 math).
    x1 = input1.astype(jnp.float32)
    x2 = input2.astype(jnp.float32)
    eps = 1e-12
    n1 = jnp.maximum(jnp.linalg.norm(x1, axis=1, keepdims=True), eps)
    n2 = jnp.maximum(jnp.linalg.norm(x2, axis=1, keepdims=True), eps)
    sim = jnp.sum((x1 / n1) * (x2 / n2), axis=1)
    lbl = label.astype(jnp.float32)
    loss = jnp.mean(lbl * (sim - 1.0) ** 2 + (1.0 - lbl) * sim ** 2)
    return loss, sim


if __name__ == "__main__":
    key = jax.random.PRNGKey(0)
    ks = jax.random.split(key, 9)

    # Case 1: f32 inputs, aligned small batch (single-tile path).
    B, D = 8, 32
    x1 = jax.random.normal(ks[0], (B, D), dtype=jnp.float32)
    x2 = jax.random.normal(ks[1], (B, D), dtype=jnp.float32)
    lbl = jax.random.uniform(ks[2], (B,), dtype=jnp.float32)
    loss, sim = wise_mse(x1, x2, lbl, return_sim=True)
    loss, sim = jax.block_until_ready((loss, sim))
    ref_loss, ref_sim = _reference(x1, x2, lbl)
    assert jnp.allclose(loss, ref_loss, atol=1e-5), (loss, ref_loss)
    assert jnp.allclose(sim, ref_sim, atol=1e-5)

    # Case 2: native bf16 inputs + ragged batch (dtype-aware 16-row alignment
    # and the zero-padding path).
    B2, D2 = 12, 40
    y1 = jax.random.normal(ks[3], (B2, D2), dtype=jnp.bfloat16)
    y2 = jax.random.normal(ks[4], (B2, D2), dtype=jnp.bfloat16)
    lbl2 = (jax.random.uniform(ks[5], (B2,)) > 0.5).astype(jnp.float32)
    loss2 = jax.block_until_ready(wise_mse(y1, y2, lbl2))
    ref_loss2, _ = _reference(y1, y2, lbl2)
    assert jnp.allclose(loss2, ref_loss2, atol=1e-4), (loss2, ref_loss2)

    # Case 3: force the tiled-reduction path (batch grid x feature grid with
    # f32 partial-sum accumulators) at a small shape.
    B3, D3 = 20, 256
    z1 = jax.random.normal(ks[6], (B3, D3), dtype=jnp.float32)
    z2 = jax.random.normal(ks[7], (B3, D3), dtype=jnp.float32)
    lbl3 = jax.random.uniform(ks[8], (B3,), dtype=jnp.float32)
    loss3, sim3 = wise_mse(z1, z2, lbl3, return_sim=True,
                           block_rows=8, block_cols=128)
    loss3, sim3 = jax.block_until_ready((loss3, sim3))
    ref_loss3, ref_sim3 = _reference(z1, z2, lbl3)
    assert jnp.allclose(loss3, ref_loss3, atol=1e-5), (loss3, ref_loss3)
    assert jnp.allclose(sim3, ref_sim3, atol=1e-5)

    print("KERNEL_OK")
</pallas_src>

<mosaic_0001>
module attributes {stable_mosaic.version = 11 : i64} {
  func.func @_wise_mse_kernel(%arg0: i32, %arg1: i32, %arg2: memref<8x32xf32, #tpu.memory_space<vmem>>, %arg3: memref<8x32xf32, #tpu.memory_space<vmem>>, %arg4: memref<8x1xf32, #tpu.memory_space<vmem>>, %arg5: memref<8x1xf32, #tpu.memory_space<vmem>>, %arg6: memref<8x1xf32, #tpu.memory_space<vmem>>, %arg7: memref<8x1xf32, #tpu.memory_space<vmem>>) attributes {dimension_semantics = [#tpu.dimension_semantics<parallel>, #tpu.dimension_semantics<arbitrary>], iteration_bounds = array<i64: 1, 1>, scalar_prefetch = 0 : i64, scratch_operands = 3 : i64, tpu.core_type = #tpu.core_type<tc>, window_params = [{transform_indices = @transform_0, window_bounds = array<i64: 8, 32>}, {transform_indices = @transform_1, window_bounds = array<i64: 8, 32>}, {transform_indices = @transform_2, window_bounds = array<i64: 8, 1>}]} {
    %c0_i32 = arith.constant 0 : i32
    %0 = arith.cmpi eq, %arg1, %c0_i32 : i32
    %1 = arith.extui %0 : i1 to i32
    %c0_i32_0 = arith.constant 0 : i32
    %2 = arith.cmpi ne, %1, %c0_i32_0 : i32
    scf.if %2 {
      %cst_23 = arith.constant 0.000000e+00 : f32
      %32 = vector.broadcast %cst_23 : f32 to vector<8x1xf32>
      %c0_24 = arith.constant 0 : index
      %c0_25 = arith.constant 0 : index
      %33 = vector.load %arg5[%c0_24, %c0_25] : memref<8x1xf32, #tpu.memory_space<vmem>>, vector<8x1xf32>
      tpu.vector_store %arg5[%c0_24, %c0_25], %32 {strides = array<i32>} : memref<8x1xf32, #tpu.memory_space<vmem>>, vector<8x1xf32>,
      %cst_26 = arith.constant 0.000000e+00 : f32
      %34 = vector.broadcast %cst_26 : f32 to vector<8x1xf32>
      %c0_27 = arith.constant 0 : index
      %c0_28 = arith.constant 0 : index
      %35 = vector.load %arg6[%c0_27, %c0_28] : memref<8x1xf32, #tpu.memory_space<vmem>>, vector<8x1xf32>
      tpu.vector_store %arg6[%c0_27, %c0_28], %34 {strides = array<i32>} : memref<8x1xf32, #tpu.memory_space<vmem>>, vector<8x1xf32>,
      %cst_29 = arith.constant 0.000000e+00 : f32
      %36 = vector.broadcast %cst_29 : f32 to vector<8x1xf32>
      %c0_30 = arith.constant 0 : index
      %c0_31 = arith.constant 0 : index
      %37 = vector.load %arg7[%c0_30, %c0_31] : memref<8x1xf32, #tpu.memory_space<vmem>>, vector<8x1xf32>
      tpu.vector_store %arg7[%c0_30, %c0_31], %36 {strides = array<i32>} : memref<8x1xf32, #tpu.memory_space<vmem>>, vector<8x1xf32>,
    } else {
    }
    %cst = arith.constant 0.000000e+00 : f32
    %3 = vector.broadcast %cst : f32 to vector<8x1xf32>
    %cst_1 = arith.constant 0.000000e+00 : f32
    %4 = vector.broadcast %cst_1 : f32 to vector<8x1xf32>
    %cst_2 = arith.constant 0.000000e+00 : f32
    %5 = vector.broadcast %cst_2 : f32 to vector<8x1xf32>
    %c0 = arith.constant 0 : index
    %c0_3 = arith.constant 0 : index
    %6 = vector.load %arg2[%c0, %c0_3] : memref<8x32xf32, #tpu.memory_space<vmem>>, vector<8x32xf32>
    %c0_4 = arith.constant 0 : index
    %c0_5 = arith.constant 0 : index
    %7 = vector.load %arg3[%c0_4, %c0_5] : memref<8x32xf32, #tpu.memory_space<vmem>>, vector<8x32xf32>
    %8 = arith.mulf %6, %6 : vector<8x32xf32>
    %cst_6 = arith.constant dense<0.000000e+00> : vector<8xf32>
    %9 = vector.multi_reduction <add>, %8, %cst_6 [1] : vector<8x32xf32> to vector<8xf32>
    %10 = vector.shape_cast %9 : vector<8xf32> to vector<8x1xf32>
    %11 = arith.addf %3, %10 : vector<8x1xf32>
    %12 = arith.mulf %7, %7 : vector<8x32xf32>
    %cst_7 = arith.constant dense<0.000000e+00> : vector<8xf32>
    %13 = vector.multi_reduction <add>, %12, %cst_7 [1] : vector<8x32xf32> to vector<8xf32>
    %14 = vector.shape_cast %13 : vector<8xf32> to vector<8x1xf32>
    %15 = arith.addf %4, %14 : vector<8x1xf32>
    %16 = arith.mulf %6, %7 : vector<8x32xf32>
    %cst_8 = arith.constant dense<0.000000e+00> : vector<8xf32>
    %17 = vector.multi_reduction <add>, %16, %cst_8 [1] : vector<8x32xf32> to vector<8xf32>
    %18 = vector.shape_cast %17 : vector<8xf32> to vector<8x1xf32>
    %19 = arith.addf %5, %18 : vector<8x1xf32>
    %c0_9 = arith.constant 0 : index
    %c0_10 = arith.constant 0 : index
    %20 = vector.load %arg5[%c0_9, %c0_10] : memref<8x1xf32, #tpu.memory_space<vmem>>, vector<8x1xf32>
    %21 = arith.addf %20, %11 : vector<8x1xf32>
    %c0_11 = arith.constant 0 : index
    %c0_12 = arith.constant 0 : index
    %22 = vector.load %arg5[%c0_11, %c0_12] : memref<8x1xf32, #tpu.memory_space<vmem>>, vector<8x1xf32>
    tpu.vector_store %arg5[%c0_11, %c0_12], %21 {strides = array<i32>} : memref<8x1xf32, #tpu.memory_space<vmem>>, vector<8x1xf32>,
    %c0_13 = arith.constant 0 : index
    %c0_14 = arith.constant 0 : index
    %23 = vector.load %arg6[%c0_13, %c0_14] : memref<8x1xf32, #tpu.memory_space<vmem>>, vector<8x1xf32>
    %24 = arith.addf %23, %15 : vector<8x1xf32>
    %c0_15 = arith.constant 0 : index
    %c0_16 = arith.constant 0 : index
    %25 = vector.load %arg6[%c0_15, %c0_16] : memref<8x1xf32, #tpu.memory_space<vmem>>, vector<8x1xf32>
    tpu.vector_store %arg6[%c0_15, %c0_16], %24 {strides = array<i32>} : memref<8x1xf32, #tpu.memory_space<vmem>>, vector<8x1xf32>,
    %c0_17 = arith.constant 0 : index
    %c0_18 = arith.constant 0 : index
    %26 = vector.load %arg7[%c0_17, %c0_18] : memref<8x1xf32, #tpu.memory_space<vmem>>, vector<8x1xf32>
    %27 = arith.addf %26, %19 : vector<8x1xf32>
    %c0_19 = arith.constant 0 : index
    %c0_20 = arith.constant 0 : index
    %28 = vector.load %arg7[%c0_19, %c0_20] : memref<8x1xf32, #tpu.memory_space<vmem>>, vector<8x1xf32>
    tpu.vector_store %arg7[%c0_19, %c0_20], %27 {strides = array<i32>} : memref<8x1xf32, #tpu.memory_space<vmem>>, vector<8x1xf32>,
    %c0_i32_21 = arith.constant 0 : i32
    %29 = arith.cmpi eq, %arg1, %c0_i32_21 : i32
    %30 = arith.extui %29 : i1 to i32
    %c0_i32_22 = arith.constant 0 : i32
    %31 = arith.cmpi ne, %30, %c0_i32_22 : i32
    scf.if %31 {
      %c0_23 = arith.constant 0 : index
      %c0_24 = arith.constant 0 : index
      %32 = vector.load %arg5[%c0_23, %c0_24] : memref<8x1xf32, #tpu.memory_space<vmem>>, vector<8x1xf32>
      %cst_25 = arith.constant 1.000000e-24 : f32
      %33 = vector.broadcast %cst_25 : f32 to vector<8x1xf32>
      %34 = arith.maximumf %32, %33 : vector<8x1xf32>
      %35 = math.rsqrt %34 : vector<8x1xf32>
      %c0_26 = arith.constant 0 : index
      %c0_27 = arith.constant 0 : index
      %36 = vector.load %arg6[%c0_26, %c0_27] : memref<8x1xf32, #tpu.memory_space<vmem>>, vector<8x1xf32>
      %cst_28 = arith.constant 1.000000e-24 : f32
      %37 = vector.broadcast %cst_28 : f32 to vector<8x1xf32>
      %38 = arith.maximumf %36, %37 : vector<8x1xf32>
      %39 = math.rsqrt %38 : vector<8x1xf32>
      %c0_29 = arith.constant 0 : index
      %c0_30 = arith.constant 0 : index
      %40 = vector.load %arg7[%c0_29, %c0_30] : memref<8x1xf32, #tpu.memory_space<vmem>>, vector<8x1xf32>
      %41 = arith.mulf %40, %35 : vector<8x1xf32>
      %42 = arith.mulf %41, %39 : vector<8x1xf32>
      %c0_31 = arith.constant 0 : index
      %c0_32 = arith.constant 0 : index
      %43 = vector.load %arg4[%c0_31, %c0_32] : memref<8x1xf32, #tpu.memory_space<vmem>>, vector<8x1xf32>
      tpu.vector_store %arg4[%c0_31, %c0_32], %42 {strides = array<i32>} : memref<8x1xf32, #tpu.memory_space<vmem>>, vector<8x1xf32>,
    } else {
    }
    return
  }
  func.func @transform_0(%arg0: i32, %arg1: i32) -> (i32, i32) {
    %c0_i32 = arith.constant 0 : i32
    return %arg0, %arg1 : i32, i32
  }
  func.func @transform_1(%arg0: i32, %arg1: i32) -> (i32, i32) {
    %c0_i32 = arith.constant 0 : i32
    return %arg0, %arg1 : i32, i32
  }
  func.func @transform_2(%arg0: i32, %arg1: i32) -> (i32, i32) {
    %c0_i32 = arith.constant 0 : i32
    %c0_i32_0 = arith.constant 0 : i32
    return %arg0, %c0_i32 : i32, i32
  }
}

</mosaic_0001>

<llo_original>
// kernel: tpu_custom_call.1
$region0: #{tpu_custom_call.1}
  #allocation0 [shape = 'u32[]', space=smem, size = 0x4, offset = 0x4, fixed_abs, tag = 'smem constant byte address 0x4 - core index']
  #allocation1 [shape = 'u32[144,128]{1,0:T(1,128)}', space=vmem, size = 0x12000, scoped, tag = 'internal scratch']
  #allocation2 [shape = 'f32[8,1]{1,0:T(8,128)}', space=vmem, size = 0x1000, scoped, tag = 'scratch operand']
  #allocation3 [shape = 'f32[8,1]{1,0:T(8,128)}', space=vmem, size = 0x1000, scoped, tag = 'scratch operand']
  #allocation4 [shape = 'f32[8,1]{1,0:T(8,128)}', space=vmem, size = 0x1000, scoped, tag = 'scratch operand']
  %s0 = inlined_call_operand.hbm [shape: f32[8,32], index: 0, kind: input, shape index: {}]
  %s1 = inlined_call_operand.hbm [shape: f32[8,32], index: 1, kind: input, shape index: {}]
  %s2 = inlined_call_operand.vmem [shape: f32[8,1], index: 2, kind: output, shape index: {}]
  %s3 = sld [smem:[#allocation0]]
  $region34: #{tpu_custom_call.1} parent=0
    _
  %s5 = ssub.s32 1, %s3
  %s6 = scalar_select 0, %s5, %s3
  $region1: #{tpu_custom_call.1} parent=0
    #allocation5 [shape = 'u8[4096]{0}', space=vmem, size = 0x1000, scoped, tag = 'input window, operand 0, single buffered']
    #allocation6 [shape = 's32[1]{0}', space=sflag, size = 0x4, scoped, tag = 'scoped memory for tpu_custom_call.1']
    #allocation7 [shape = 'u8[4096]{0}', space=vmem, size = 0x1000, scoped, tag = 'input window, operand 1, single buffered']
    #allocation8 [shape = 's32[1]{0}', space=sflag, size = 0x4, scoped, tag = 'scoped memory for tpu_custom_call.1']
    %7 = vsyncpa [#allocation6], 0
    %8 = vsyncpa [#allocation8], 0
    // Predicated region
    $region2: #{tpu_custom_call.1} parent=1 // pred_check
      _
    $region3: #{tpu_custom_call.1} parent=1 // pred_check_branch
      %10 = sbr.rel (0) target = $region5
    $region4: #{tpu_custom_call.1} parent=1 // pred_region
      %s12 = ssub.s32 128, 128
      %13 = vsyncadd [#allocation6], %s12
      %s15 = sshll.u32 [#allocation5], 4
      %s16 = int_to_ptr.vmem [resolvable:$true] %s15
      %18 = dma.hbm_to_vmem [thread:$0]  %s0, 128, %s16, [#allocation6]
    $region5: #{tpu_custom_call.1} parent=1 // pred_fallthru
      _
    // Predicated region
    $region6: #{tpu_custom_call.1} parent=1 // pred_check
      _
    $region7: #{tpu_custom_call.1} parent=1 // pred_check_branch
      %20 = sbr.rel (0) target = $region9
    $region8: #{tpu_custom_call.1} parent=1 // pred_region
      %s22 = ssub.s32 128, 128
      %23 = vsyncadd [#allocation8], %s22
      %s25 = sshll.u32 [#allocation7], 4
      %s26 = int_to_ptr.vmem [resolvable:$true] %s25
      %28 = dma.hbm_to_vmem [thread:$0]  %s1, 128, %s26, [#allocation8]
    $region9: #{tpu_custom_call.1} parent=1 // pred_fallthru
      _
    // Predicated region
    $region10: #{tpu_custom_call.1} parent=1 // pred_check
      _
    $region11: #{tpu_custom_call.1} parent=1 // pred_check_branch
      %30 = sbr.rel (0) target = $region13
    $region12: #{tpu_custom_call.1} parent=1 // pred_region
      %31 = dma.done [#allocation6], 128
    $region13: #{tpu_custom_call.1} parent=1 // pred_fallthru
      _
    // Predicated region
    $region14: #{tpu_custom_call.1} parent=1 // pred_check
      _
    $region15: #{tpu_custom_call.1} parent=1 // pred_check_branch
      %33 = sbr.rel (0) target = $region17
    $region16: #{tpu_custom_call.1} parent=1 // pred_region
      %34 = dma.done [#allocation8], 128
    $region17: #{tpu_custom_call.1} parent=1 // pred_fallthru
      _
    %p35 = scmp.eq.s32.totalorder 0, 0
    // Predicated region
    $region18: #{tpu_custom_call.1} parent=1 // pred_check
      %p36 = pneg %p35
    $region19: #{tpu_custom_call.1} parent=1 // pred_check_branch
      %38 = sbr.rel (%p36) target = $region21
    $region20: #{tpu_custom_call.1} parent=1 // pred_region
      %vm39 = vcmask 7168
      %40 = vst.msk [vmem:[#allocation2] sm:$0xff] %vm39, 0.0
      %41 = vst.msk [vmem:[#allocation3] sm:$0xff] %vm39, 0.0
      %42 = vst.msk [vmem:[#allocation4] sm:$0xff] %vm39, 0.0
    $region21: #{tpu_custom_call.1} parent=1 // pred_fallthru
      _
    %v43 = vld [vmem:[#allocation5] sm:$0xff]
    %v44 = vld [vmem:[#allocation7] sm:$0xff]
    %v45 = vmul.f32 %v43, %v43
    %vm46 = vcmask 261120
    %v47 = vsel %vm46, %v45, 0.0
    %48 = vadd.xlane.f32.xlu0 %v47
    %v49 = vpop.xlane.xlu0 %48
    %v50 = vadd.f32 %v49, 0.0
    %v51 = vmul.f32 %v44, %v44
    %v52 = vsel %vm46, %v51, 0.0
    %53 = vadd.xlane.f32.xlu0 %v52
    %v54 = vpop.xlane.xlu0 %53
    %v55 = vadd.f32 %v54, 0.0
    %v56 = vmul.f32 %v43, %v44
    %v57 = vsel %vm46, %v56, 0.0
    %58 = vadd.xlane.f32.xlu0 %v57
    %v59 = vpop.xlane.xlu0 %58
    %v60 = vadd.f32 %v59, 0.0
    %v61 = vld [vmem:[#allocation2] sm:$0xff]
    %v62 = vadd.f32 %v61, %v50
    %vm63 = vcmask 7168
    %64 = vst.msk [vmem:[#allocation2] sm:$0xff] %vm63, %v62
    %v65 = vld [vmem:[#allocation3] sm:$0xff]
    %v66 = vadd.f32 %v65, %v55
    %67 = vst.msk [vmem:[#allocation3] sm:$0xff] %vm63, %v66
    %v68 = vld [vmem:[#allocation4] sm:$0xff]
    %v69 = vadd.f32 %v68, %v60
    %70 = vst.msk [vmem:[#allocation4] sm:$0xff] %vm63, %v69
    // Predicated region
    $region22: #{tpu_custom_call.1} parent=1 // pred_check
      %p71 = pneg %p35
    $region23: #{tpu_custom_call.1} parent=1 // pred_check_branch
      %73 = sbr.rel (%p71) target = $region25
    $region24: #{tpu_custom_call.1} parent=1 // pred_region
      %v74 = vld [vmem:[#allocation2] sm:$0xff]
      %v75 = vmax.f32 %v74, 1e-24
      %v76 = vrsqrt.pop %v75
      %v77 = vld [vmem:[#allocation3] sm:$0xff]
      %v78 = vmax.f32 %v77, 1e-24
      %v79 = vrsqrt.pop %v78
      %v80 = vld [vmem:[#allocation4] sm:$0xff]
      %v81 = vmul.f32 %v80, %v76
      %v82 = vmul.f32 %v81, %v79
      %83 = vst.msk [vmem:[%s2] sm:$0xff] %vm63, %v82
    $region25: #{tpu_custom_call.1} parent=1 // pred_fallthru
      _
    // Predicated region
    $region26: #{tpu_custom_call.1} parent=1 // pred_check
      _
    $region27: #{tpu_custom_call.1} parent=1 // pred_check_branch
      %85 = sbr.rel (0) target = $region29
    $region28: #{tpu_custom_call.1} parent=1 // pred_region
      _
    $region29: #{tpu_custom_call.1} parent=1 // pred_fallthru
      _
    // Predicated region
    $region30: #{tpu_custom_call.1} parent=1 // pred_check
      _
    $region31: #{tpu_custom_call.1} parent=1 // pred_check_branch
      %87 = sbr.rel (0) target = $region33
    $region32: #{tpu_custom_call.1} parent=1 // pred_region
      _
    $region33: #{tpu_custom_call.1} parent=1 // pred_fallthru
      _
    %88 = vsyncpa [#allocation6], 1
    %89 = vsyncpa [#allocation8], 1

</llo_original>
